<compile_context>
chip_gen: v6e
topology: v6e:2x2x1
jax: 0.10.0
libtpu: 0.0.40
codegen_flags: <defaults>
</compile_context>

<pallas_src>
import jax
import jax.numpy as jnp
from jax import lax
from jax.experimental import pallas as pl
from jax.experimental.pallas import tpu as pltpu


def _round_up(x, m):
    return (x + m - 1) // m * m


def _crossnet_kernel(x0_ref, wt_ref, b_ref, out_ref):
    # x0_ref : (TB, Dp)            batch tile of x0
    # wt_ref : (L, Dp, Dp) bf16    PRE-TRANSPOSED weights, layout (in, out)
    # b_ref  : (L, 1, Dp)  f32
    # out_ref: (TB, Dp)
    x0 = x0_ref[...].astype(jnp.float32)
    xi = x0
    num_layers = wt_ref.shape[0]
    # cross_order is small & static -> unrolled Python loop keeps the MXU fed.
    for l in range(num_layers):
        w = wt_ref[l]                              # (Dp_in, Dp_out), MXU-native RHS
        b = b_ref[l].astype(jnp.float32)           # (1, Dp)
        lin = jnp.dot(xi.astype(w.dtype), w,
                      preferred_element_type=jnp.float32) + b
        # Residual / elementwise update in f32.
        xi = x0 * lin + xi
    out_ref[...] = xi.astype(out_ref.dtype)


def prepare_crossnet_params(weights, biases, *, param_dtype=jnp.bfloat16):
    """One-time parameter prep (call at model init, NOT per forward).

    weights: (L, D, D)  nn.Linear layout (out, in)
    biases : (L, D)

    Returns:
      wt_p: (L, Dp, Dp) param_dtype -- transposed to (in, out), 128-padded
      b_p : (L, 1, Dp)  float32     -- 128-padded

    Zero-padding is exact: padded rows/cols of W and padded bias entries are
    zero, so lin and xi stay identically zero in padded feature columns.
    Pass param_dtype=jnp.float32 for an accuracy-first path (2x resident VMEM).
    """
    L, D, _ = weights.shape
    Dp = _round_up(D, 128)
    wt = jnp.transpose(weights, (0, 2, 1))                    # (L, in, out)
    if Dp != D:
        wt = jnp.pad(wt, ((0, 0), (0, Dp - D), (0, Dp - D)))
        biases = jnp.pad(biases, ((0, 0), (0, Dp - D)))
    wt_p = wt.astype(param_dtype)
    b_p = biases.reshape(L, 1, Dp).astype(jnp.float32)
    return wt_p, b_p


def _vmem_budget_bytes():
    """Generation-aware VMEM cap (leave Mosaic headroom below physical)."""
    try:
        phys = pltpu.get_tpu_info().vmem_capacity_bytes
    except Exception:
        phys = 64 << 20                      # conservative (v7x-sized) default
    if phys >= (100 << 20):                  # v5e / v6e: 128 MiB physical
        return 100 << 20
    return 52 << 20                          # v7x: 64 MiB physical


def _tile_need_bytes(tb, Dp, resident_bytes):
    # Honest accounting: x0 + out double-buffered (f32) plus ~6 live f32
    # (TB, Dp) temporaries (x0, xi, bf16 cast, dot result, lin, update) + slack.
    io = 2 * 2 * tb * Dp * 4
    tmp = 6 * tb * Dp * 4
    return resident_bytes + io + tmp + (4 << 20)


def _pick_batch_tile(B, Dp, resident_bytes, budget):
    # Biggest tile that fits the VMEM budget, multiple of 16, and gives
    # >= 2 grid steps whenever the batch permits (megacore on v7x,
    # DMA/compute overlap everywhere).
    cap = 1024
    if B > 16:
        cap = min(cap, max(16, _round_up(pl.cdiv(B, 2), 16)))
    tb = min(_round_up(B, 16), cap)
    tb = max(16, _round_up(tb, 16))
    while tb > 16 and _tile_need_bytes(tb, Dp, resident_bytes) > budget:
        tb = max(16, _round_up(tb // 2, 16))
    return tb


def crossnet_forward(x0, wt_p, b_p, *, batch_tile=None, out_dtype=None):
    """CrossNet forward.

    x0:   (B, D) float
    wt_p: (L, Dp, Dp) prepared weights (transposed, padded, cast) from
          prepare_crossnet_params
    b_p:  (L, 1, Dp) prepared biases (padded, f32)
    """
    B, D = x0.shape
    L, Dp, _ = wt_p.shape
    if out_dtype is None:
        out_dtype = x0.dtype  # pass jnp.bfloat16 to halve output HBM traffic
                              # for small-D (mem-bound) configs if tolerated.

    budget = _vmem_budget_bytes()
    resident = L * Dp * Dp * jnp.dtype(wt_p.dtype).itemsize + L * Dp * 4

    if batch_tile is None:
        batch_tile = _pick_batch_tile(B, Dp, resident, budget)
    else:
        batch_tile = max(16, _round_up(batch_tile, 16))
    need = _tile_need_bytes(batch_tile, Dp, resident)
    Bp = _round_up(max(B, batch_tile), batch_tile)

    x0_p = x0 if (Bp, Dp) == (B, D) else jnp.pad(x0, ((0, Bp - B), (0, Dp - D)))

    vmem_limit = int(min(max(need, 32 << 20), budget))
    # TODO(synk): when resident weights alone exceed ~24 MiB on v7x (~64 MiB on
    # v5e/v6e), switch to per-layer N-tiled weight streaming via
    # pltpu.emit_pipeline while keeping xi in a VMEM scratch.

    grid = (Bp // batch_tile,)

    out_p = pl.pallas_call(
        _crossnet_kernel,
        out_shape=jax.ShapeDtypeStruct((Bp, Dp), out_dtype),
        grid_spec=pltpu.PrefetchScalarGridSpec(
            num_scalar_prefetch=0,
            grid=grid,
            in_specs=[
                pl.BlockSpec((batch_tile, Dp), lambda i: (i, 0)),
                # Constant index_map -> fetched once; single buffer halves
                # the resident weight VMEM footprint vs default double-buffer.
                pl.BlockSpec((L, Dp, Dp), lambda i: (0, 0, 0),
                             pipeline_mode=pl.Buffered(1)),
                pl.BlockSpec((L, 1, Dp), lambda i: (0, 0, 0),
                             pipeline_mode=pl.Buffered(1)),
            ],
            out_specs=pl.BlockSpec((batch_tile, Dp), lambda i: (i, 0)),
        ),
        compiler_params=pltpu.CompilerParams(
            dimension_semantics=("parallel",),
            vmem_limit_bytes=vmem_limit),
    )(x0_p, wt_p, b_p)

    if (Bp, Dp) != (B, D):
        out_p = out_p[:B, :D]
    return out_p


def crossnet_ref(x0, weights, biases, param_dtype=None):
    """Plain-JAX reference mirroring the PyTorch module.

    param_dtype=None -> pure f32 math; otherwise dot operands are cast to
    param_dtype with f32 accumulation (mirrors the kernel's MXU precision).
    """
    x0 = x0.astype(jnp.float32)
    xi = x0
    dims = (((1,), (1,)), ((), ()))  # xi @ W^T with W in (out, in) layout
    for l in range(weights.shape[0]):
        w = weights[l]
        a = xi
        if param_dtype is not None:
            w = w.astype(param_dtype)
            a = a.astype(param_dtype)
        lin = lax.dot_general(a, w, dimension_numbers=dims,
                              preferred_element_type=jnp.float32) + biases[l]
        xi = x0 * lin + xi
    return xi


if __name__ == "__main__":
    B, D, CROSS_ORDER = 64, 32, 3

    key = jax.random.PRNGKey(0)
    kx, kw, kb = jax.random.split(key, 3)

    x0 = jax.random.normal(kx, (B, D), dtype=jnp.float32)
    # Deterministic parameter init (uniform like nn.Linear default scale).
    bound = 1.0 / (D ** 0.5)
    weights = jax.random.uniform(kw, (CROSS_ORDER, D, D), jnp.float32,
                                 minval=-bound, maxval=bound)
    biases = jax.random.uniform(kb, (CROSS_ORDER, D), jnp.float32,
                                minval=-bound, maxval=bound)

    # One-time param prep (transpose + pad + bf16 cast) -- done outside the
    # forward path, as it would be at model init.
    wt_p, b_p = prepare_crossnet_params(weights, biases,
                                        param_dtype=jnp.bfloat16)

    out = crossnet_forward(x0, wt_p, b_p)   # auto tile -> >=2-step parallel grid
    out = jax.block_until_ready(out)
    assert out.shape == (B, D)

    # Tight check against a precision-matched (bf16-operand, f32-accum) ref.
    ref_matched = crossnet_ref(x0, weights, biases, param_dtype=jnp.bfloat16)
    assert jnp.allclose(out, ref_matched, atol=1e-2, rtol=1e-2), \
        "mismatch vs precision-matched reference"

    # Looser check against the pure-f32 PyTorch-equivalent reference.
    ref_f32 = crossnet_ref(x0, weights, biases)
    assert jnp.allclose(out, ref_f32, atol=1e-1, rtol=1e-1), \
        "mismatch vs f32 reference"

    print("KERNEL_OK")
</pallas_src>

<mosaic_0001>
module attributes {stable_mosaic.version = 11 : i64} {
  func.func @_crossnet_kernel(%arg0: i32, %arg1: memref<32x128xf32, #tpu.memory_space<vmem>>, %arg2: memref<3x128x128xbf16, #tpu.memory_space<vmem>>, %arg3: memref<3x1x128xf32, #tpu.memory_space<vmem>>, %arg4: memref<32x128xf32, #tpu.memory_space<vmem>>) attributes {dimension_semantics = [#tpu.dimension_semantics<parallel>], iteration_bounds = array<i64: 2>, scalar_prefetch = 0 : i64, scratch_operands = 0 : i64, tpu.core_type = #tpu.core_type<tc>, window_params = [{transform_indices = @transform_0, window_bounds = array<i64: 32, 128>}, {pipeline_mode = #tpu.pipeline_mode<synchronous>, transform_indices = @transform_1, window_bounds = array<i64: 3, 128, 128>}, {pipeline_mode = #tpu.pipeline_mode<synchronous>, transform_indices = @transform_2, window_bounds = array<i64: 3, 1, 128>}, {transform_indices = @transform_3, window_bounds = array<i64: 32, 128>}]} {
    %c0 = arith.constant 0 : index
    %c0_0 = arith.constant 0 : index
    %0 = vector.load %arg1[%c0, %c0_0] : memref<32x128xf32, #tpu.memory_space<vmem>>, vector<32x128xf32>
    %c0_1 = arith.constant 0 : index
    %c0_2 = arith.constant 0 : index
    %c0_3 = arith.constant 0 : index
    %1 = vector.load %arg2[%c0_1, %c0_2, %c0_3] : memref<3x128x128xbf16, #tpu.memory_space<vmem>>, vector<1x128x128xbf16>
    %2 = vector.shape_cast %1 : vector<1x128x128xbf16> to vector<128x128xbf16>
    %c0_4 = arith.constant 0 : index
    %c0_5 = arith.constant 0 : index
    %c0_6 = arith.constant 0 : index
    %3 = vector.load %arg3[%c0_4, %c0_5, %c0_6] : memref<3x1x128xf32, #tpu.memory_space<vmem>>, vector<1x1x128xf32>
    %4 = vector.shape_cast %3 : vector<1x1x128xf32> to vector<1x128xf32>
    %5 = arith.truncf %0 : vector<32x128xf32> to vector<32x128xbf16>
    %cst = arith.constant dense<0.000000e+00> : vector<32x128xf32>
    %6 = tpu.matmul %5, %2, %cst {dimension_numbers = #tpu.dot_dimension_numbers<[1], [0], [0], [1], [0, 0, 1, 1], [], []>} : vector<32x128xbf16>, vector<128x128xbf16>, vector<32x128xf32> -> vector<32x128xf32>
    %7 = vector.broadcast %4 : vector<1x128xf32> to vector<32x128xf32>
    %8 = arith.addf %6, %7 : vector<32x128xf32>
    %9 = arith.mulf %0, %8 : vector<32x128xf32>
    %10 = arith.addf %9, %0 : vector<32x128xf32>
    %c1 = arith.constant 1 : index
    %c0_7 = arith.constant 0 : index
    %c0_8 = arith.constant 0 : index
    %11 = vector.load %arg2[%c1, %c0_7, %c0_8] : memref<3x128x128xbf16, #tpu.memory_space<vmem>>, vector<1x128x128xbf16>
    %12 = vector.shape_cast %11 : vector<1x128x128xbf16> to vector<128x128xbf16>
    %c1_9 = arith.constant 1 : index
    %c0_10 = arith.constant 0 : index
    %c0_11 = arith.constant 0 : index
    %13 = vector.load %arg3[%c1_9, %c0_10, %c0_11] : memref<3x1x128xf32, #tpu.memory_space<vmem>>, vector<1x1x128xf32>
    %14 = vector.shape_cast %13 : vector<1x1x128xf32> to vector<1x128xf32>
    %15 = arith.truncf %10 : vector<32x128xf32> to vector<32x128xbf16>
    %cst_12 = arith.constant dense<0.000000e+00> : vector<32x128xf32>
    %16 = tpu.matmul %15, %12, %cst_12 {dimension_numbers = #tpu.dot_dimension_numbers<[1], [0], [0], [1], [0, 0, 1, 1], [], []>} : vector<32x128xbf16>, vector<128x128xbf16>, vector<32x128xf32> -> vector<32x128xf32>
    %17 = vector.broadcast %14 : vector<1x128xf32> to vector<32x128xf32>
    %18 = arith.addf %16, %17 : vector<32x128xf32>
    %19 = arith.mulf %0, %18 : vector<32x128xf32>
    %20 = arith.addf %19, %10 : vector<32x128xf32>
    %c2 = arith.constant 2 : index
    %c0_13 = arith.constant 0 : index
    %c0_14 = arith.constant 0 : index
    %21 = vector.load %arg2[%c2, %c0_13, %c0_14] : memref<3x128x128xbf16, #tpu.memory_space<vmem>>, vector<1x128x128xbf16>
    %22 = vector.shape_cast %21 : vector<1x128x128xbf16> to vector<128x128xbf16>
    %c2_15 = arith.constant 2 : index
    %c0_16 = arith.constant 0 : index
    %c0_17 = arith.constant 0 : index
    %23 = vector.load %arg3[%c2_15, %c0_16, %c0_17] : memref<3x1x128xf32, #tpu.memory_space<vmem>>, vector<1x1x128xf32>
    %24 = vector.shape_cast %23 : vector<1x1x128xf32> to vector<1x128xf32>
    %25 = arith.truncf %20 : vector<32x128xf32> to vector<32x128xbf16>
    %cst_18 = arith.constant dense<0.000000e+00> : vector<32x128xf32>
    %26 = tpu.matmul %25, %22, %cst_18 {dimension_numbers = #tpu.dot_dimension_numbers<[1], [0], [0], [1], [0, 0, 1, 1], [], []>} : vector<32x128xbf16>, vector<128x128xbf16>, vector<32x128xf32> -> vector<32x128xf32>
    %27 = vector.broadcast %24 : vector<1x128xf32> to vector<32x128xf32>
    %28 = arith.addf %26, %27 : vector<32x128xf32>
    %29 = arith.mulf %0, %28 : vector<32x128xf32>
    %30 = arith.addf %29, %20 : vector<32x128xf32>
    %c0_19 = arith.constant 0 : index
    %c0_20 = arith.constant 0 : index
    %31 = vector.load %arg4[%c0_19, %c0_20] : memref<32x128xf32, #tpu.memory_space<vmem>>, vector<32x128xf32>
    tpu.vector_store %arg4[%c0_19, %c0_20], %30 {strides = array<i32>} : memref<32x128xf32, #tpu.memory_space<vmem>>, vector<32x128xf32>,
    return
  }
  func.func @transform_0(%arg0: i32) -> (i32, i32) {
    %c0_i32 = arith.constant 0 : i32
    %c0_i32_0 = arith.constant 0 : i32
    return %arg0, %c0_i32 : i32, i32
  }
  func.func @transform_1(%arg0: i32) -> (i32, i32, i32) {
    %c0_i32 = arith.constant 0 : i32
    %c0_i32_0 = arith.constant 0 : i32
    %c0_i32_1 = arith.constant 0 : i32
    %c0_i32_2 = arith.constant 0 : i32
    return %c0_i32, %c0_i32_0, %c0_i32_1 : i32, i32, i32
  }
  func.func @transform_2(%arg0: i32) -> (i32, i32, i32) {
    %c0_i32 = arith.constant 0 : i32
    %c0_i32_0 = arith.constant 0 : i32
    %c0_i32_1 = arith.constant 0 : i32
    %c0_i32_2 = arith.constant 0 : i32
    return %c0_i32, %c0_i32_0, %c0_i32_1 : i32, i32, i32
  }
  func.func @transform_3(%arg0: i32) -> (i32, i32) {
    %c0_i32 = arith.constant 0 : i32
    %c0_i32_0 = arith.constant 0 : i32
    return %arg0, %c0_i32 : i32, i32
  }
}

</mosaic_0001>

<llo_original>
// kernel: tpu_custom_call.1
$region0: #{tpu_custom_call.1}
  #allocation0 [shape = 'u32[]', space=smem, size = 0x4, offset = 0x4, fixed_abs, tag = 'smem constant byte address 0x4 - core index']
  #allocation1 [shape = 'u32[144,128]{1,0:T(1,128)}', space=vmem, size = 0x12000, scoped, tag = 'internal scratch']
  %s0 = inlined_call_operand.hbm [shape: f32[64,128], index: 0, kind: input, shape index: {}]
  %s1 = inlined_call_operand.hbm [shape: bf16[3,128,128], index: 1, kind: input, shape index: {}]
  %s2 = inlined_call_operand.vmem [shape: f32[3,1,128], index: 2, kind: input, shape index: {}]
  %s3 = inlined_call_operand.hbm [shape: f32[64,128], index: 3, kind: output, shape index: {}]
  %s4 = sld [smem:[#allocation0]]
  $region53: #{tpu_custom_call.1} parent=0
    _
  %s6 = ssub.s32 1, %s4
  %s7 = scalar_select 0, %s6, %s4
  $region1: #{tpu_custom_call.1} parent=0
    #allocation2 [shape = 'u8[32768]{0}', space=vmem, size = 0x8000, scoped, tag = 'input window, operand 0']
    #allocation3 [shape = 's32[2]{0}', space=sflag, size = 0x8, scoped, tag = 'scoped memory for tpu_custom_call.1']
    #allocation4 [shape = 's32[2]{0}', space=sflag, size = 0x8, scoped, tag = 'scoped memory for tpu_custom_call.1']
    #allocation5 [shape = 'u8[98304]{0}', space=vmem, size = 0x18000, scoped, tag = 'input window, operand 1, single buffered']
    #allocation6 [shape = 's32[1]{0}', space=sflag, size = 0x4, scoped, tag = 'scoped memory for tpu_custom_call.1']
    #allocation7 [shape = 'u8[32768]{0}', space=vmem, size = 0x8000, scoped, tag = 'output window, operand 0']
    %8 = vsyncpa [#allocation3], 0
    %s9 = scalar_lea.sflag [#allocation3], 1
    %10 = vsyncpa %s9, 0
    %11 = vsyncpa [#allocation6], 0
    %12 = vsyncpa [#allocation4], 0
    %s13 = scalar_lea.sflag [#allocation4], 1
    %14 = vsyncpa %s13, 0
    loop: start=0, step=1, limit=4
    $region2: #{tpu_custom_call.1} parent=1 // loop_pre_header
      _
    $region3: #{tpu_custom_call.1} parent=1 // loop_header
      %s16 = sphi 0, %s20
      %p17 = scmp.ge.s32.totalorder %s16, 4
      %s26 = sphi 0, %s28
      %s29 = sphi 0, %s26
      %s30 = sphi 0, %s29
      %s46 = sphi 0, %s30
      %s50 = sphi 0, %s50
      %s52 = sphi 0, %s50
      %s53 = sphi 0, %s52
      %s67 = sphi 0, %s53
      %s71 = sphi 0, %s71
      %s73 = sphi 0, %s71
      %s74 = sphi 0, %s73
      %s88 = sphi 0, %s74
      %s94 = sphi 0, %s96
      %s97 = sphi 0, %s94
      %s98 = sphi 0, %s97
      %s114 = sphi 0, %s98
    $region4: #{tpu_custom_call.1} parent=1 // loop_header_branch
      %19 = sbr.rel (%p17) target = $region8
    $region5: #{tpu_custom_call.1} parent=1 // loop_body
      %s21 = ssub.s32 %s16, 1
      %s22 = ssub.s32 %s16, 2
      %s23 = sadd.s32 %s16, 1
      %s24 = ssub.s32 %s16, %s23
      %p25 = scmp.eq.s32.totalorder %s24, 0
      %s27 = sadd.s32 %s26, 1
      %s28 = scalar_select %p25, %s26, %s27
      %p31 = pneg %p25
      %p32 = scmp.eq.s32.totalorder %s16, 1
      %p33 = por %p31, %p32
      %p34 = scmp.ne.s32.totalorder %s26, %s29
      %p35 = scmp.eq.s32.totalorder %s16, 0
      %p36 = por %p34, %p35
      %p37 = scmp.ne.s32.totalorder %s26, %s29
      %p38 = scmp.eq.s32.totalorder %s21, 1
      %p39 = por %p37, %p38
      %p40 = scmp.ne.s32.totalorder %s29, %s30
      %p41 = scmp.eq.s32.totalorder %s21, 0
      %p42 = por %p40, %p41
      %p43 = scmp.ne.s32.totalorder %s29, %s30
      %p44 = scmp.eq.s32.totalorder %s22, 1
      %p45 = por %p43, %p44
      %p47 = scmp.ne.s32.totalorder %s30, %s46
      %p48 = scmp.eq.s32.totalorder %s22, 0
      %p49 = por %p47, %p48
      %s51 = sadd.s32 %s50, 1
      %p54 = scmp.eq.s32.totalorder %s16, 1
      %p55 = scmp.ne.s32.totalorder %s50, %s52
      %p56 = scmp.eq.s32.totalorder %s16, 0
      %p57 = por %p55, %p56
      %p58 = scmp.ne.s32.totalorder %s50, %s52
      %p59 = scmp.eq.s32.totalorder %s21, 1
      %p60 = por %p58, %p59
      %p61 = scmp.ne.s32.totalorder %s52, %s53
      %p62 = scmp.eq.s32.totalorder %s21, 0
      %p63 = por %p61, %p62
      %p64 = scmp.ne.s32.totalorder %s52, %s53
      %p65 = scmp.eq.s32.totalorder %s22, 1
      %p66 = por %p64, %p65
      %p68 = scmp.ne.s32.totalorder %s53, %s67
      %p69 = scmp.eq.s32.totalorder %s22, 0
      %p70 = por %p68, %p69
      %s72 = sadd.s32 %s71, 1
      %p75 = scmp.eq.s32.totalorder %s16, 1
      %p76 = scmp.ne.s32.totalorder %s71, %s73
      %p77 = scmp.eq.s32.totalorder %s16, 0
      %p78 = por %p76, %p77
      %p79 = scmp.ne.s32.totalorder %s71, %s73
      %p80 = scmp.eq.s32.totalorder %s21, 1
      %p81 = por %p79, %p80
      %p82 = scmp.ne.s32.totalorder %s73, %s74
      %p83 = scmp.eq.s32.totalorder %s21, 0
      %p84 = por %p82, %p83
      %p85 = scmp.ne.s32.totalorder %s73, %s74
      %p86 = scmp.eq.s32.totalorder %s22, 1
      %p87 = por %p85, %p86
      %p89 = scmp.ne.s32.totalorder %s74, %s88
      %p90 = scmp.eq.s32.totalorder %s22, 0
      %p91 = por %p89, %p90
      %s92 = ssub.s32 %s16, %s23
      %p93 = scmp.eq.s32.totalorder %s92, 0
      %s95 = sadd.s32 %s94, 1
      %s96 = scalar_select %p93, %s94, %s95
      %p99 = pneg %p93
      %p100 = scmp.eq.s32.totalorder %s16, 1
      %p101 = por %p99, %p100
      %p102 = scmp.ne.s32.totalorder %s94, %s97
      %p103 = scmp.eq.s32.totalorder %s16, 0
      %p104 = por %p102, %p103
      %p105 = scmp.ne.s32.totalorder %s94, %s97
      %p106 = scmp.eq.s32.totalorder %s21, 1
      %p107 = por %p105, %p106
      %p108 = scmp.ne.s32.totalorder %s97, %s98
      %p109 = scmp.eq.s32.totalorder %s21, 0
      %p110 = por %p108, %p109
      %p111 = scmp.ne.s32.totalorder %s97, %s98
      %p112 = scmp.eq.s32.totalorder %s22, 1
      %p113 = por %p111, %p112
      %p115 = scmp.ne.s32.totalorder %s98, %s114
      %p116 = scmp.eq.s32.totalorder %s22, 0
      %p117 = por %p115, %p116
      %p118 = scmp.le.s32.totalorder 1, %s16
      %p119 = scmp.lt.s32.totalorder %s16, 3
      %p120 = pnand %p118, %p119
      %p121 = pneg %p120
      // Predicated region
      $region9: #{tpu_custom_call.1} parent=5 // pred_check
        _
      $region10: #{tpu_custom_call.1} parent=5 // pred_check_branch
        %123 = sbr.rel (%p120) target = $region12
      $region11: #{tpu_custom_call.1} parent=5 // pred_region
        %s124 = ssub.s32 %s16, 1
        // Predicated region
        $region13: #{tpu_custom_call.1} parent=11 // pred_check
          %p125 = pneg %p63
        $region14: #{tpu_custom_call.1} parent=11 // pred_check_branch
          %127 = sbr.rel (%p125) target = $region16
        $region15: #{tpu_custom_call.1} parent=11 // pred_region
          %s129 = ssub.s32 3072, 3072
          %130 = vsyncadd [#allocation6], %s129
          %s131 = sshll.u32 [#allocation5], 4
          %s132 = int_to_ptr.vmem [resolvable:$true] %s131
          %137 = dma.hbm_to_vmem [thread:$0]  %s1, 3072, %s132, [#allocation6], 64, 64, 4
        $region16: #{tpu_custom_call.1} parent=11 // pred_fallthru
          _
        // Predicated region
        $region17: #{tpu_custom_call.1} parent=11 // pred_check
          %p138 = pneg %p84
        $region18: #{tpu_custom_call.1} parent=11 // pred_check_branch
          %140 = sbr.rel (%p138) target = $region20
        $region19: #{tpu_custom_call.1} parent=11 // pred_region
          _
        $region20: #{tpu_custom_call.1} parent=11 // pred_fallthru
          _
      $region12: #{tpu_custom_call.1} parent=5 // pred_fallthru
        _
      %p141 = scmp.lt.s32.totalorder %s16, 2
      // Predicated region
      $region21: #{tpu_custom_call.1} parent=5 // pred_check
        %p142 = pneg %p141
      $region22: #{tpu_custom_call.1} parent=5 // pred_check_branch
        %144 = sbr.rel (%p142) target = $region24
      $region23: #{tpu_custom_call.1} parent=5 // pred_region
        // Predicated region
        $region25: #{tpu_custom_call.1} parent=23 // pred_check
          %p145 = pneg %p36
        $region26: #{tpu_custom_call.1} parent=23 // pred_check_branch
          %147 = sbr.rel (%p145) target = $region28
        $region27: #{tpu_custom_call.1} parent=23 // pred_region
          %s148 = sand.u32 %s26, 1
          %s149 = scalar_lea.sflag [#allocation3], %s148
          %s150 = sand.u32 %s26, 1
          %s151 = smul.addr %s150, 32
          %s152 = scalar_lea.vmem [#allocation2], %s151
          %s153 = smul.u32 4, %s16
          %s155 = ssub.s32 512, 512
          %156 = vsyncadd %s149, %s155
          %s157 = smul.addr %s153, 128
          %s158 = scalar_lea.hbm %s0, %s157
          %s159 = sshll.u32 %s152, 4
          %s160 = int_to_ptr.vmem [resolvable:$true] %s159
          %165 = dma.hbm_to_vmem [thread:$0]  %s158, 512, %s160, %s149, 128, 128, 8
        $region28: #{tpu_custom_call.1} parent=23 // pred_fallthru
          _
      $region24: #{tpu_custom_call.1} parent=5 // pred_fallthru
        _
      %p166 = scmp.le.s32.totalorder 1, %s16
      %p167 = scmp.lt.s32.totalorder %s16, 3
      %p168 = pnand %p166, %p167
      %p169 = pneg %p168
      // Predicated region
      $region29: #{tpu_custom_call.1} parent=5 // pred_check
        _
      $region30: #{tpu_custom_call.1} parent=5 // pred_check_branch
        %171 = sbr.rel (%p168) target = $region32
      $region31: #{tpu_custom_call.1} parent=5 // pred_region
        %s172 = ssub.s32 %s16, 1
        %s173 = sand.u32 %s29, 1
        %s174 = scalar_lea.sflag [#allocation3], %s173
        %s175 = sand.u32 %s29, 1
        %s176 = smul.addr %s175, 32
        %s177 = scalar_lea.vmem [#allocation2], %s176
        // Predicated region
        $region33: #{tpu_custom_call.1} parent=31 // pred_check
          %p178 = pneg %p42
        $region34: #{tpu_custom_call.1} parent=31 // pred_check_branch
          %180 = sbr.rel (%p178) target = $region36
        $region35: #{tpu_custom_call.1} parent=31 // pred_region
          %181 = dma.done %s174, 512
        $region36: #{tpu_custom_call.1} parent=31 // pred_fallthru
          _
        // Predicated region
        $region37: #{tpu_custom_call.1} parent=31 // pred_check
          %p182 = pneg %p63
        $region38: #{tpu_custom_call.1} parent=31 // pred_check_branch
          %184 = sbr.rel (%p182) target = $region40
        $region39: #{tpu_custom_call.1} parent=31 // pred_region
          %185 = dma.done [#allocation6], 3072
        $region40: #{tpu_custom_call.1} parent=31 // pred_fallthru
          _
        %s186 = sand.u32 %s29, 1
        %s187 = scalar_lea.sflag [#allocation3], %s186
        %s188 = sand.u32 %s29, 1
        %s189 = smul.addr %s188, 32
        %s190 = scalar_lea.vmem [#allocation2], %s189
        %p191 = pneg %p42
        %p192 = pneg %p39
        %p193 = pneg %p63
        %p194 = pneg %p60
        %p195 = pneg %p84
        %p196 = pneg %p81
        %p197 = pneg %p110
        %p198 = pneg %p107
        %s199 = sand.u32 %s97, 1
        %s200 = scalar_lea.sflag [#allocation4], %s199
        %s201 = sand.u32 %s97, 1
        %s202 = smul.addr %s201, 32
        %s203 = scalar_lea.vmem [#allocation7], %s202
        %s204 = smul.u32 4, %s21
        %s205 = smul.u32 4, %s21
        %v207 = vld [vmem:[%s177] sm:$0xff]
        %v208 = vld [vmem:[%s177 + $0x8] sm:$0xff]
        %v209 = vld [vmem:[%s177 + $0x10] sm:$0xff]
        %v210 = vld [vmem:[%s177 + $0x18] sm:$0xff]
        %v211 = vld [vmem:[#allocation5] sm:$0xf]
        %v212 = vld [vmem:[#allocation5 + $0x4] sm:$0xf]
        %v213 = vld [vmem:[#allocation5 + $0x8] sm:$0xf]
        %v214 = vld [vmem:[#allocation5 + $0xc] sm:$0xf]
        %v215 = vld [vmem:[#allocation5 + $0x10] sm:$0xf]
        %v216 = vld [vmem:[#allocation5 + $0x14] sm:$0xf]
        %v217 = vld [vmem:[#allocation5 + $0x18] sm:$0xf]
        %v218 = vld [vmem:[#allocation5 + $0x1c] sm:$0xf]
        %v219 = vld [vmem:[#allocation5 + $0x20] sm:$0xf]
        %v220 = vld [vmem:[#allocation5 + $0x24] sm:$0xf]
        %v221 = vld [vmem:[#allocation5 + $0x28] sm:$0xf]
        %v222 = vld [vmem:[#allocation5 + $0x2c] sm:$0xf]
        %v223 = vld [vmem:[#allocation5 + $0x30] sm:$0xf]
        %v224 = vld [vmem:[#allocation5 + $0x34] sm:$0xf]
        %v225 = vld [vmem:[#allocation5 + $0x38] sm:$0xf]
        %v226 = vld [vmem:[#allocation5 + $0x3c] sm:$0xf]
        %v227 = vld [vmem:[%s2] sm:$0x1]
        %v228 = vpack.c.bf16 %v208, %v207
        %v229 = vpack.c.bf16 %v210, %v209
        %v231 = vlaneseq
        %v232 = vshrl.u32 %v231, 7
        %v233 = vsub.s32 0, %v232
        %v234 = vrot.slane %v227, %v233
        %v252 = vunpack.c.l.b16 %v211
        %v253 = vunpack.c.l.b16 %v212
        %v254 = vunpack.c.l.b16 %v213
        %v255 = vunpack.c.l.b16 %v214
        %v256 = vunpack.c.l.b16 %v215
        %v257 = vunpack.c.l.b16 %v216
        %v258 = vunpack.c.l.b16 %v217
        %v259 = vunpack.c.l.b16 %v218
        %v260 = vunpack.c.l.b16 %v219
        %v261 = vunpack.c.l.b16 %v220
        %v262 = vunpack.c.l.b16 %v221
        %v263 = vunpack.c.l.b16 %v222
        %v264 = vunpack.c.l.b16 %v223
        %v265 = vunpack.c.l.b16 %v224
        %v266 = vunpack.c.l.b16 %v225
        %v267 = vunpack.c.l.b16 %v226
        %v268 = vpack.c.b16 %v253, %v252
        %v269 = vpack.c.b16 %v255, %v254
        %v270 = vpack.c.b16 %v257, %v256
        %v271 = vpack.c.b16 %v259, %v258
        %v272 = vpack.c.b16 %v261, %v260
        %v273 = vpack.c.b16 %v263, %v262
        %v274 = vpack.c.b16 %v265, %v264
        %v275 = vpack.c.b16 %v267, %v266
        %284 = vmatprep.subr.bf16.mxu0 0
        %285 = vmatpush1.bf16.msra.mxu0 %v275
        %286 = vmatprep.subr.bf16.mxu0 0
        %287 = vmatpush1.bf16.msra.mxu0 %v274
        %288 = vmatprep.subr.bf16.mxu0 0
        %289 = vmatpush1.bf16.msra.mxu0 %v273
        %290 = vmatprep.subr.bf16.mxu0 0
        %291 = vmatpush1.bf16.msra.mxu0 %v272
        %292 = vmatprep.subr.bf16.mxu0 0
        %293 = vmatpush1.bf16.msra.mxu0 %v271
        %294 = vmatprep.subr.bf16.mxu0 0
        %295 = vmatpush1.bf16.msra.mxu0 %v270
        %296 = vmatprep.subr.bf16.mxu0 0
        %297 = vmatpush1.bf16.msra.mxu0 %v269
        %298 = vmatprep.subr.bf16.mxu0 0
        %299 = vmatpush1.bf16.msra.mxu0 %v268
        %300 = vmatprep.subr.bf16.mxu0 0
        %301 = vmatpush2.bf16.msra.mxu0 0
        %302 = vmatprep.subr.bf16.mxu0 0
        %303 = vmatpush2.bf16.msra.mxu0 0
        %304 = vmatprep.subr.bf16.mxu0 0
        %305 = vmatpush2.bf16.msra.mxu0 0
        %306 = vmatprep.subr.bf16.mxu0 0
        %307 = vmatpush2.bf16.msra.mxu0 0
        %308 = vmatprep.subr.bf16.mxu0 0
        %309 = vmatpush2.bf16.msra.mxu0 0
        %310 = vmatprep.subr.bf16.mxu0 0
        %311 = vmatpush2.bf16.msra.mxu0 0
        %312 = vmatprep.subr.bf16.mxu0 0
        %313 = vmatpush2.bf16.msra.mxu0 0
        %314 = vmatprep.subr.bf16.mxu0 0
        %315 = vmatpush2.bf16.msra.mxu0 0
        %316 = vmatprep.mubr.bf16.mxu0 0
        %317 = vmatmul.mubr.bf16.gmra.mxu0 %v228
        %v318 = vpop.f32.mrf.mxu0
        %v319 = vadd.f32 %v234, %v318
        %v320 = vpop.f32.mrf.mxu0
        %v321 = vpop.f32.mrf.mxu0
        %v322 = vadd.f32 %v234, %v321
        %v323 = vpop.f32.mrf.mxu0
        %324 = vmatprep.mubr.bf16.mxu0 0
        %325 = vmatmul.mubr.bf16.gmra.mxu0 %v229
        %v326 = vpop.f32.mrf.mxu0
        %v327 = vadd.f32 %v234, %v326
        %v328 = vpop.f32.mrf.mxu0
        %v329 = vpop.f32.mrf.mxu0
        %v330 = vadd.f32 %v234, %v329
        %v331 = vpop.f32.mrf.mxu0
        %332 = vdwg.mxu0
        %v333 = vmul.f32 %v207, %v319
        %v334 = vmul.f32 %v208, %v322
        %v335 = vmul.f32 %v209, %v327
        %v336 = vmul.f32 %v210, %v330
        %v337 = vadd.f32 %v333, %v207
        %v338 = vadd.f32 %v334, %v208
        %v339 = vadd.f32 %v335, %v209
        %v340 = vadd.f32 %v336, %v210
        %s341 = scalar_lea.vmem [#allocation5], 64
        %v342 = vld [vmem:[%s341] sm:$0xf]
        %v343 = vld [vmem:[%s341 + $0x4] sm:$0xf]
        %v344 = vld [vmem:[%s341 + $0x8] sm:$0xf]
        %v345 = vld [vmem:[%s341 + $0xc] sm:$0xf]
        %v346 = vld [vmem:[%s341 + $0x10] sm:$0xf]
        %v347 = vld [vmem:[%s341 + $0x14] sm:$0xf]
        %v348 = vld [vmem:[%s341 + $0x18] sm:$0xf]
        %v349 = vld [vmem:[%s341 + $0x1c] sm:$0xf]
        %v350 = vld [vmem:[%s341 + $0x20] sm:$0xf]
        %v351 = vld [vmem:[%s341 + $0x24] sm:$0xf]
        %v352 = vld [vmem:[%s341 + $0x28] sm:$0xf]
        %v353 = vld [vmem:[%s341 + $0x2c] sm:$0xf]
        %v354 = vld [vmem:[%s341 + $0x30] sm:$0xf]
        %v355 = vld [vmem:[%s341 + $0x34] sm:$0xf]
        %v356 = vld [vmem:[%s341 + $0x38] sm:$0xf]
        %v357 = vld [vmem:[%s341 + $0x3c] sm:$0xf]
        %s358 = scalar_lea.vmem %s2, 1
        %v359 = vld [vmem:[%s358] sm:$0x1]
        %v360 = vpack.c.bf16 %v338, %v337
        %v361 = vpack.c.bf16 %v340, %v339
        %v363 = vlaneseq
        %v364 = vshrl.u32 %v363, 7
        %v365 = vsub.s32 0, %v364
        %v366 = vrot.slane %v359, %v365
        %v384 = vunpack.c.l.b16 %v342
        %v385 = vunpack.c.l.b16 %v343
        %v386 = vunpack.c.l.b16 %v344
        %v387 = vunpack.c.l.b16 %v345
        %v388 = vunpack.c.l.b16 %v346
        %v389 = vunpack.c.l.b16 %v347
        %v390 = vunpack.c.l.b16 %v348
        %v391 = vunpack.c.l.b16 %v349
        %v392 = vunpack.c.l.b16 %v350
        %v393 = vunpack.c.l.b16 %v351
        %v394 = vunpack.c.l.b16 %v352
        %v395 = vunpack.c.l.b16 %v353
        %v396 = vunpack.c.l.b16 %v354
        %v397 = vunpack.c.l.b16 %v355
        %v398 = vunpack.c.l.b16 %v356
        %v399 = vunpack.c.l.b16 %v357
        %v400 = vpack.c.b16 %v385, %v384
        %v401 = vpack.c.b16 %v387, %v386
        %v402 = vpack.c.b16 %v389, %v388
        %v403 = vpack.c.b16 %v391, %v390
        %v404 = vpack.c.b16 %v393, %v392
        %v405 = vpack.c.b16 %v395, %v394
        %v406 = vpack.c.b16 %v397, %v396
        %v407 = vpack.c.b16 %v399, %v398
        %416 = vmatprep.subr.bf16.mxu0 0
        %417 = vmatpush1.bf16.msra.mxu0 %v407
        %418 = vmatprep.subr.bf16.mxu0 0
        %419 = vmatpush1.bf16.msra.mxu0 %v406
        %420 = vmatprep.subr.bf16.mxu0 0
        %421 = vmatpush1.bf16.msra.mxu0 %v405
        %422 = vmatprep.subr.bf16.mxu0 0
        %423 = vmatpush1.bf16.msra.mxu0 %v404
        %424 = vmatprep.subr.bf16.mxu0 0
        %425 = vmatpush1.bf16.msra.mxu0 %v403
        %426 = vmatprep.subr.bf16.mxu0 0
        %427 = vmatpush1.bf16.msra.mxu0 %v402
        %428 = vmatprep.subr.bf16.mxu0 0
        %429 = vmatpush1.bf16.msra.mxu0 %v401
        %430 = vmatprep.subr.bf16.mxu0 0
        %431 = vmatpush1.bf16.msra.mxu0 %v400
        %432 = vmatprep.subr.bf16.mxu0 0
        %433 = vmatpush2.bf16.msra.mxu0 0
        %434 = vmatprep.subr.bf16.mxu0 0
        %435 = vmatpush2.bf16.msra.mxu0 0
        %436 = vmatprep.subr.bf16.mxu0 0
        %437 = vmatpush2.bf16.msra.mxu0 0
        %438 = vmatprep.subr.bf16.mxu0 0
        %439 = vmatpush2.bf16.msra.mxu0 0
        %440 = vmatprep.subr.bf16.mxu0 0
        %441 = vmatpush2.bf16.msra.mxu0 0
        %442 = vmatprep.subr.bf16.mxu0 0
        %443 = vmatpush2.bf16.msra.mxu0 0
        %444 = vmatprep.subr.bf16.mxu0 0
        %445 = vmatpush2.bf16.msra.mxu0 0
        %446 = vmatprep.subr.bf16.mxu0 0
        %447 = vmatpush2.bf16.msra.mxu0 0
        %448 = vmatprep.mubr.bf16.mxu0 0
        %449 = vmatmul.mubr.bf16.gmra.mxu0 %v360
        %v450 = vpop.f32.mrf.mxu0
        %v451 = vadd.f32 %v366, %v450
        %v452 = vpop.f32.mrf.mxu0
        %v453 = vpop.f32.mrf.mxu0
        %v454 = vadd.f32 %v366, %v453
        %v455 = vpop.f32.mrf.mxu0
        %456 = vmatprep.mubr.bf16.mxu0 0
        %457 = vmatmul.mubr.bf16.gmra.mxu0 %v361
        %v458 = vpop.f32.mrf.mxu0
        %v459 = vadd.f32 %v366, %v458
        %v460 = vpop.f32.mrf.mxu0
        %v461 = vpop.f32.mrf.mxu0
        %v462 = vadd.f32 %v366, %v461
        %v463 = vpop.f32.mrf.mxu0
        %464 = vdwg.mxu0
        %v465 = vmul.f32 %v207, %v451
        %v466 = vmul.f32 %v208, %v454
        %v467 = vmul.f32 %v209, %v459
        %v468 = vmul.f32 %v210, %v462
        %v469 = vadd.f32 %v465, %v337
        %v470 = vadd.f32 %v466, %v338
        %v471 = vadd.f32 %v467, %v339
        %v472 = vadd.f32 %v468, %v340
        %s473 = scalar_lea.vmem [#allocation5], 128
        %v474 = vld [vmem:[%s473] sm:$0xf]
        %v475 = vld [vmem:[%s473 + $0x4] sm:$0xf]
        %v476 = vld [vmem:[%s473 + $0x8] sm:$0xf]
        %v477 = vld [vmem:[%s473 + $0xc] sm:$0xf]
        %v478 = vld [vmem:[%s473 + $0x10] sm:$0xf]
        %v479 = vld [vmem:[%s473 + $0x14] sm:$0xf]
        %v480 = vld [vmem:[%s473 + $0x18] sm:$0xf]
        %v481 = vld [vmem:[%s473 + $0x1c] sm:$0xf]
        %v482 = vld [vmem:[%s473 + $0x20] sm:$0xf]
        %v483 = vld [vmem:[%s473 + $0x24] sm:$0xf]
        %v484 = vld [vmem:[%s473 + $0x28] sm:$0xf]
        %v485 = vld [vmem:[%s473 + $0x2c] sm:$0xf]
        %v486 = vld [vmem:[%s473 + $0x30] sm:$0xf]
        %v487 = vld [vmem:[%s473 + $0x34] sm:$0xf]
        %v488 = vld [vmem:[%s473 + $0x38] sm:$0xf]
        %v489 = vld [vmem:[%s473 + $0x3c] sm:$0xf]
        %s490 = scalar_lea.vmem %s2, 2
        %v491 = vld [vmem:[%s490] sm:$0x1]
        %v492 = vpack.c.bf16 %v470, %v469
        %v493 = vpack.c.bf16 %v472, %v471
        %v495 = vlaneseq
        %v496 = vshrl.u32 %v495, 7
        %v497 = vsub.s32 0, %v496
        %v498 = vrot.slane %v491, %v497
        %v516 = vunpack.c.l.b16 %v474
        %v517 = vunpack.c.l.b16 %v475
        %v518 = vunpack.c.l.b16 %v476
        %v519 = vunpack.c.l.b16 %v477
        %v520 = vunpack.c.l.b16 %v478
        %v521 = vunpack.c.l.b16 %v479
        %v522 = vunpack.c.l.b16 %v480
        %v523 = vunpack.c.l.b16 %v481
        %v524 = vunpack.c.l.b16 %v482
        %v525 = vunpack.c.l.b16 %v483
        %v526 = vunpack.c.l.b16 %v484
        %v527 = vunpack.c.l.b16 %v485
        %v528 = vunpack.c.l.b16 %v486
        %v529 = vunpack.c.l.b16 %v487
        %v530 = vunpack.c.l.b16 %v488
        %v531 = vunpack.c.l.b16 %v489
        %v532 = vpack.c.b16 %v517, %v516
        %v533 = vpack.c.b16 %v519, %v518
        %v534 = vpack.c.b16 %v521, %v520
        %v535 = vpack.c.b16 %v523, %v522
        %v536 = vpack.c.b16 %v525, %v524
        %v537 = vpack.c.b16 %v527, %v526
        %v538 = vpack.c.b16 %v529, %v528
        %v539 = vpack.c.b16 %v531, %v530
        %548 = vmatprep.subr.bf16.mxu0 0
        %549 = vmatpush1.bf16.msra.mxu0 %v539
        %550 = vmatprep.subr.bf16.mxu0 0
        %551 = vmatpush1.bf16.msra.mxu0 %v538
        %552 = vmatprep.subr.bf16.mxu0 0
        %553 = vmatpush1.bf16.msra.mxu0 %v537
        %554 = vmatprep.subr.bf16.mxu0 0
        %555 = vmatpush1.bf16.msra.mxu0 %v536
        %556 = vmatprep.subr.bf16.mxu0 0
        %557 = vmatpush1.bf16.msra.mxu0 %v535
        %558 = vmatprep.subr.bf16.mxu0 0
        %559 = vmatpush1.bf16.msra.mxu0 %v534
        %560 = vmatprep.subr.bf16.mxu0 0
        %561 = vmatpush1.bf16.msra.mxu0 %v533
        %562 = vmatprep.subr.bf16.mxu0 0
        %563 = vmatpush1.bf16.msra.mxu0 %v532
        %564 = vmatprep.subr.bf16.mxu0 0
        %565 = vmatpush2.bf16.msra.mxu0 0
        %566 = vmatprep.subr.bf16.mxu0 0
        %567 = vmatpush2.bf16.msra.mxu0 0
        %568 = vmatprep.subr.bf16.mxu0 0
        %569 = vmatpush2.bf16.msra.mxu0 0
        %570 = vmatprep.subr.bf16.mxu0 0
        %571 = vmatpush2.bf16.msra.mxu0 0
        %572 = vmatprep.subr.bf16.mxu0 0
        %573 = vmatpush2.bf16.msra.mxu0 0
        %574 = vmatprep.subr.bf16.mxu0 0
        %575 = vmatpush2.bf16.msra.mxu0 0
        %576 = vmatprep.subr.bf16.mxu0 0
        %577 = vmatpush2.bf16.msra.mxu0 0
        %578 = vmatprep.subr.bf16.mxu0 0
        %579 = vmatpush2.bf16.msra.mxu0 0
        %580 = vmatprep.mubr.bf16.mxu0 0
        %581 = vmatmul.mubr.bf16.gmra.mxu0 %v492
        %v582 = vpop.f32.mrf.mxu0
        %v583 = vadd.f32 %v498, %v582
        %v584 = vpop.f32.mrf.mxu0
        %v585 = vpop.f32.mrf.mxu0
        %v586 = vadd.f32 %v498, %v585
        %v587 = vpop.f32.mrf.mxu0
        %588 = vmatprep.mubr.bf16.mxu0 0
        %589 = vmatmul.mubr.bf16.gmra.mxu0 %v493
        %v590 = vpop.f32.mrf.mxu0
        %v591 = vadd.f32 %v498, %v590
        %v592 = vpop.f32.mrf.mxu0
        %v593 = vpop.f32.mrf.mxu0
        %v594 = vadd.f32 %v498, %v593
        %v595 = vpop.f32.mrf.mxu0
        %596 = vdwg.mxu0
        %v597 = vmul.f32 %v207, %v583
        %v598 = vmul.f32 %v208, %v586
        %v599 = vmul.f32 %v209, %v591
        %v600 = vmul.f32 %v210, %v594
        %v601 = vadd.f32 %v597, %v469
        %v602 = vadd.f32 %v598, %v470
        %v603 = vadd.f32 %v599, %v471
        %v604 = vadd.f32 %v600, %v472
        %605 = vst [vmem:[%s203] sm:$0xff] %v601
        %606 = vst [vmem:[%s203 + $0x8] sm:$0xff] %v602
        %607 = vst [vmem:[%s203 + $0x10] sm:$0xff] %v603
        %608 = vst [vmem:[%s203 + $0x18] sm:$0xff] %v604
        %s609 = sand.u32 %s97, 1
        %s610 = scalar_lea.sflag [#allocation4], %s609
        %s611 = sand.u32 %s97, 1
        %s612 = smul.addr %s611, 32
        %s613 = scalar_lea.vmem [#allocation7], %s612
        // Predicated region
        $region41: #{tpu_custom_call.1} parent=31 // pred_check
          %p614 = pneg %p107
        $region42: #{tpu_custom_call.1} parent=31 // pred_check_branch
          %616 = sbr.rel (%p614) target = $region44
        $region43: #{tpu_custom_call.1} parent=31 // pred_region
          %s617 = smul.u32 4, %s21
          %s619 = ssub.s32 512, 512
          %620 = vsyncadd %s610, %s619
          %s621 = smul.addr %s617, 128
          %s622 = scalar_lea.hbm %s3, %s621
          %s623 = sshll.u32 %s613, 4
          %s624 = int_to_ptr.vmem [resolvable:$true] %s623
          %629 = dma.vmem_to_hbm [thread:$0]  %s624, 512, %s622, %s610, 128, 128, 8
        $region44: #{tpu_custom_call.1} parent=31 // pred_fallthru
          _
      $region32: #{tpu_custom_call.1} parent=5 // pred_fallthru
        _
      %p630 = scmp.le.s32.totalorder 2, %s16
      // Predicated region
      $region45: #{tpu_custom_call.1} parent=5 // pred_check
        %p631 = pneg %p630
      $region46: #{tpu_custom_call.1} parent=5 // pred_check_branch
        %633 = sbr.rel (%p631) target = $region48
      $region47: #{tpu_custom_call.1} parent=5 // pred_region
        %s634 = ssub.s32 %s16, 2
        // Predicated region
        $region49: #{tpu_custom_call.1} parent=47 // pred_check
          %p635 = pneg %p113
        $region50: #{tpu_custom_call.1} parent=47 // pred_check_branch
          %637 = sbr.rel (%p635) target = $region52
        $region51: #{tpu_custom_call.1} parent=47 // pred_region
          %s638 = sand.u32 %s98, 1
          %s639 = scalar_lea.sflag [#allocation4], %s638
          %s640 = sand.u32 %s98, 1
          %s641 = smul.addr %s640, 32
          %s642 = scalar_lea.vmem [#allocation7], %s641
          %643 = dma.done %s639, 512
        $region52: #{tpu_custom_call.1} parent=47 // pred_fallthru
          _
      $region48: #{tpu_custom_call.1} parent=5 // pred_fallthru
        _
    $region6: #{tpu_custom_call.1} parent=1 // loop_footer
      %s20 = sadd.s32 1, %s16
    $region7: #{tpu_custom_call.1} parent=1 // loop_footer_branch
      %15 = sbr.rel target = $region3
    $region8: #{tpu_custom_call.1} parent=1 // loop_exit
      _
    %644 = vsyncpa [#allocation3], 1
    %s645 = scalar_lea.sflag [#allocation3], 1
    %646 = vsyncpa %s645, 1
    %647 = vsyncpa [#allocation6], 1
    %648 = vsyncpa [#allocation4], 1
    %s649 = scalar_lea.sflag [#allocation4], 1
    %650 = vsyncpa %s649, 1

</llo_original>
